<compile_context>
chip_gen: v5e
topology: v5e:2x2
jax: 0.10.0
libtpu: 0.0.40
codegen_flags: <defaults>
</compile_context>

<pallas_src>
import functools

import jax
import jax.numpy as jnp
from jax import lax
from jax.experimental import pallas as pl
from jax.experimental.pallas import tpu as pltpu


def _round_up(x, m):
    return (x + m - 1) // m * m


def _generator_kernel(points_ref, plane_ref, mask_ref, h2_ref, h3_ref, *, c_actual):
    # points_ref: (B, Nt, D)   plane_ref: (B, D, Pp)   mask_ref: (Pp, Cp)
    # h2_ref:     (B, Nt, Cp)  h3_ref:    (B, Nt)      (all f32, lane-dense)
    B = points_ref.shape[0]
    mask = mask_ref[...]                                  # precomputed 0/1 mask

    h2_parts = []
    for b in range(B):  # B is small and static -> unrolled 2-D MXU matmuls
        # First matmul: K = D (=4).  MXU-latency-bound but tiny; kept as a dot
        # so numerics match the plain-XLA reference.
        h1 = jnp.dot(points_ref[b], plane_ref[b],
                     preferred_element_type=jnp.float32)            # (Nt, Pp)
        h1 = jnp.maximum(h1, 0.0)                                   # relu (VPU)
        # Second matmul is the real MXU work: (Nt, Pp) @ (Pp, Cp), lane-dense.
        h2_parts.append(jnp.dot(h1, mask,
                                preferred_element_type=jnp.float32))  # (Nt, Cp)

    h2 = jnp.stack(h2_parts, axis=0)                      # (B, Nt, Cp)
    h2_ref[...] = h2.astype(h2_ref.dtype)

    # Min over the real convex units only: padded lanes (>= c_actual) -> +inf.
    lane = lax.broadcasted_iota(jnp.int32, h2.shape, 2)
    h2_min_in = jnp.where(lane < c_actual, h2, jnp.inf)
    h3_ref[...] = jnp.min(h2_min_in, axis=-1).astype(h3_ref.dtype)  # (B, Nt)


def generator_forward(points, plane_m, convex_layer_weights, *, n_tile=512):
    """points: [B, N, D] f32, plane_m: [B, D, P] f32, weights: [P, C] f32."""
    B, N, D = points.shape
    _, D2, P = plane_m.shape
    P2, C = convex_layer_weights.shape
    assert D == D2 and P == P2

    # Hoisted out of the kernel: threshold mask computed once.
    mask = (convex_layer_weights > 0.01).astype(jnp.float32)

    # Lane-dense padding: P, C to multiples of 128; N to a multiple of the tile.
    Pp = _round_up(P, 128)
    Cp = _round_up(C, 128)
    Np = _round_up(N, 128)
    Nt = min(_round_up(n_tile, 128), Np)
    while Np % Nt:
        Nt -= 128

    points_p = jnp.pad(points, ((0, 0), (0, Np - N), (0, 0)))
    plane_p = jnp.pad(plane_m, ((0, 0), (0, 0), (0, Pp - P)))
    mask_p = jnp.pad(mask, ((0, Pp - P), (0, Cp - C)))

    out_shapes = (
        jax.ShapeDtypeStruct((B, Np, Cp), jnp.float32),   # h2 (padded)
        jax.ShapeDtypeStruct((B, Np), jnp.float32),       # h3 (lane-dense, padded)
    )

    grid_spec = pltpu.PrefetchScalarGridSpec(
        num_scalar_prefetch=0,
        grid=(Np // Nt,),
        in_specs=[
            pl.BlockSpec((B, Nt, D), lambda n: (0, n, 0)),   # points, N-tile
            pl.BlockSpec((B, D, Pp), lambda n: (0, 0, 0)),   # plane_m (resident)
            pl.BlockSpec((Pp, Cp), lambda n: (0, 0)),        # mask (resident)
        ],
        out_specs=[
            pl.BlockSpec((B, Nt, Cp), lambda n: (0, n, 0)),  # h2
            pl.BlockSpec((B, Nt), lambda n: (0, n)),         # h3 lane-dense
        ],
    )

    h2_p, h3_p = pl.pallas_call(
        functools.partial(_generator_kernel, c_actual=C),
        out_shape=out_shapes,
        grid_spec=grid_spec,
        compiler_params=pltpu.CompilerParams(
            dimension_semantics=("parallel",)),
    )(points_p, plane_p, mask_p)

    h2 = h2_p[:, :N, :C]
    h3 = h3_p[:, :N].reshape(B, N, 1)
    return h2, h3


def _reference_forward(points, plane_m, w):
    h1 = jnp.maximum(jnp.einsum("bnd,bdp->bnp", points, plane_m), 0.0)
    h2 = jnp.einsum("bnp,pc->bnc", h1, (w > 0.01).astype(jnp.float32))
    h3 = jnp.min(h2, axis=2, keepdims=True)
    return h2, h3


if __name__ == "__main__":
    # Small shapes consistent with the module's forward:
    #   points [B, N, 4], plane_m [B, 4, p_dim], weights [p_dim, c_dim]
    B, N, D = 2, 64, 4
    p_dim, c_dim = 32, 16

    key = jax.random.PRNGKey(0)
    k_pts, k_plane, k_w = jax.random.split(key, 3)

    points = jax.random.normal(k_pts, (B, N, D), dtype=jnp.float32)
    plane_m = jax.random.normal(k_plane, (B, D, p_dim), dtype=jnp.float32)
    # nn.init.normal_(convex_layer_weights, mean=0.0, std=0.02)
    convex_layer_weights = 0.02 * jax.random.normal(
        k_w, (p_dim, c_dim), dtype=jnp.float32)

    h2, h3 = generator_forward(points, plane_m, convex_layer_weights)
    jax.block_until_ready((h2, h3))

    h2_ref, h3_ref = _reference_forward(points, plane_m, convex_layer_weights)
    assert h2.shape == (B, N, c_dim) and h3.shape == (B, N, 1)
    assert jnp.allclose(h2, h2_ref, atol=1e-5, rtol=1e-5)
    assert jnp.allclose(h3, h3_ref, atol=1e-5, rtol=1e-5)

    print("KERNEL_OK")
</pallas_src>

<mosaic_0001>
module attributes {stable_mosaic.version = 11 : i64} {
  func.func @_generator_kernel(%arg0: i32, %arg1: memref<2x128x4xf32, #tpu.memory_space<vmem>>, %arg2: memref<2x4x128xf32, #tpu.memory_space<vmem>>, %arg3: memref<128x128xf32, #tpu.memory_space<vmem>>, %arg4: memref<2x128x128xf32, #tpu.memory_space<vmem>>, %arg5: memref<2x128xf32, #tpu.memory_space<vmem>>) attributes {dimension_semantics = [#tpu.dimension_semantics<parallel>], iteration_bounds = array<i64: 1>, scalar_prefetch = 0 : i64, scratch_operands = 0 : i64, tpu.core_type = #tpu.core_type<tc>, window_params = [{transform_indices = @transform_0, window_bounds = array<i64: 2, 128, 4>}, {pipeline_mode = #tpu.pipeline_mode<synchronous>, transform_indices = @transform_1, window_bounds = array<i64: 2, 4, 128>}, {pipeline_mode = #tpu.pipeline_mode<synchronous>, transform_indices = @transform_2, window_bounds = array<i64: 128, 128>}, {transform_indices = @transform_3, window_bounds = array<i64: 2, 128, 128>}, {transform_indices = @transform_4, window_bounds = array<i64: 2, 128>}]} {
    %c0 = arith.constant 0 : index
    %c0_0 = arith.constant 0 : index
    %0 = vector.load %arg3[%c0, %c0_0] : memref<128x128xf32, #tpu.memory_space<vmem>>, vector<128x128xf32>
    %c0_1 = arith.constant 0 : index
    %c0_2 = arith.constant 0 : index
    %c0_3 = arith.constant 0 : index
    %1 = vector.load %arg1[%c0_1, %c0_2, %c0_3] : memref<2x128x4xf32, #tpu.memory_space<vmem>>, vector<1x128x4xf32>
    %2 = vector.shape_cast %1 : vector<1x128x4xf32> to vector<128x4xf32>
    %c0_4 = arith.constant 0 : index
    %c0_5 = arith.constant 0 : index
    %c0_6 = arith.constant 0 : index
    %3 = vector.load %arg2[%c0_4, %c0_5, %c0_6] : memref<2x4x128xf32, #tpu.memory_space<vmem>>, vector<1x4x128xf32>
    %4 = vector.shape_cast %3 : vector<1x4x128xf32> to vector<4x128xf32>
    %cst = arith.constant dense<0.000000e+00> : vector<128x128xf32>
    %5 = tpu.matmul %2, %4, %cst {dimension_numbers = #tpu.dot_dimension_numbers<[1], [0], [0], [1], [0, 0, 1, 1], [], []>} : vector<128x4xf32>, vector<4x128xf32>, vector<128x128xf32> -> vector<128x128xf32>
    %cst_7 = arith.constant 0.000000e+00 : f32
    %6 = vector.broadcast %cst_7 : f32 to vector<128x128xf32>
    %7 = arith.maximumf %5, %6 : vector<128x128xf32>
    %cst_8 = arith.constant dense<0.000000e+00> : vector<128x128xf32>
    %8 = tpu.matmul %7, %0, %cst_8 {dimension_numbers = #tpu.dot_dimension_numbers<[1], [0], [0], [1], [0, 0, 1, 1], [], []>} : vector<128x128xf32>, vector<128x128xf32>, vector<128x128xf32> -> vector<128x128xf32>
    %c1 = arith.constant 1 : index
    %c0_9 = arith.constant 0 : index
    %c0_10 = arith.constant 0 : index
    %9 = vector.load %arg1[%c1, %c0_9, %c0_10] : memref<2x128x4xf32, #tpu.memory_space<vmem>>, vector<1x128x4xf32>
    %10 = vector.shape_cast %9 : vector<1x128x4xf32> to vector<128x4xf32>
    %c1_11 = arith.constant 1 : index
    %c0_12 = arith.constant 0 : index
    %c0_13 = arith.constant 0 : index
    %11 = vector.load %arg2[%c1_11, %c0_12, %c0_13] : memref<2x4x128xf32, #tpu.memory_space<vmem>>, vector<1x4x128xf32>
    %12 = vector.shape_cast %11 : vector<1x4x128xf32> to vector<4x128xf32>
    %cst_14 = arith.constant dense<0.000000e+00> : vector<128x128xf32>
    %13 = tpu.matmul %10, %12, %cst_14 {dimension_numbers = #tpu.dot_dimension_numbers<[1], [0], [0], [1], [0, 0, 1, 1], [], []>} : vector<128x4xf32>, vector<4x128xf32>, vector<128x128xf32> -> vector<128x128xf32>
    %cst_15 = arith.constant 0.000000e+00 : f32
    %14 = vector.broadcast %cst_15 : f32 to vector<128x128xf32>
    %15 = arith.maximumf %13, %14 : vector<128x128xf32>
    %cst_16 = arith.constant dense<0.000000e+00> : vector<128x128xf32>
    %16 = tpu.matmul %15, %0, %cst_16 {dimension_numbers = #tpu.dot_dimension_numbers<[1], [0], [0], [1], [0, 0, 1, 1], [], []>} : vector<128x128xf32>, vector<128x128xf32>, vector<128x128xf32> -> vector<128x128xf32>
    %17 = vector.shape_cast %8 : vector<128x128xf32> to vector<1x128x128xf32>
    %18 = vector.shape_cast %16 : vector<128x128xf32> to vector<1x128x128xf32>
    %19 = tpu.concatenate %17, %18 in 0 : vector<1x128x128xf32>, vector<1x128x128xf32> -> vector<2x128x128xf32>
    %c0_17 = arith.constant 0 : index
    %c0_18 = arith.constant 0 : index
    %c0_19 = arith.constant 0 : index
    %20 = vector.load %arg4[%c0_17, %c0_18, %c0_19] : memref<2x128x128xf32, #tpu.memory_space<vmem>>, vector<2x128x128xf32>
    tpu.vector_store %arg4[%c0_17, %c0_18, %c0_19], %19 {strides = array<i32>} : memref<2x128x128xf32, #tpu.memory_space<vmem>>, vector<2x128x128xf32>,
    %21 = tpu.iota {dimensions = array<i32: 2>} : vector<2x128x128xi32>
    %c16_i32 = arith.constant 16 : i32
    %22 = vector.broadcast %c16_i32 : i32 to vector<2x128x128xi32>
    %23 = arith.cmpi slt, %21, %22 : vector<2x128x128xi32>
    %cst_20 = arith.constant 0x7F800000 : f32
    %24 = vector.broadcast %cst_20 : f32 to vector<2x128x128xf32>
    %25 = arith.select %23, %19, %24 : vector<2x128x128xi1>, vector<2x128x128xf32>
    %cst_21 = arith.constant dense<0x7F800000> : vector<2x128xf32>
    %26 = vector.multi_reduction <minimumf>, %25, %cst_21 [2] : vector<2x128x128xf32> to vector<2x128xf32>
    %c0_22 = arith.constant 0 : index
    %c0_23 = arith.constant 0 : index
    %27 = vector.load %arg5[%c0_22, %c0_23] : memref<2x128xf32, #tpu.memory_space<vmem>>, vector<2x128xf32>
    tpu.vector_store %arg5[%c0_22, %c0_23], %26 {strides = array<i32>} : memref<2x128xf32, #tpu.memory_space<vmem>>, vector<2x128xf32>,
    return
  }
  func.func @transform_0(%arg0: i32) -> (i32, i32, i32) {
    %c0_i32 = arith.constant 0 : i32
    %c0_i32_0 = arith.constant 0 : i32
    %c0_i32_1 = arith.constant 0 : i32
    return %c0_i32, %arg0, %c0_i32_0 : i32, i32, i32
  }
  func.func @transform_1(%arg0: i32) -> (i32, i32, i32) {
    %c0_i32 = arith.constant 0 : i32
    %c0_i32_0 = arith.constant 0 : i32
    %c0_i32_1 = arith.constant 0 : i32
    %c0_i32_2 = arith.constant 0 : i32
    return %c0_i32, %c0_i32_0, %c0_i32_1 : i32, i32, i32
  }
  func.func @transform_2(%arg0: i32) -> (i32, i32) {
    %c0_i32 = arith.constant 0 : i32
    %c0_i32_0 = arith.constant 0 : i32
    %c0_i32_1 = arith.constant 0 : i32
    return %c0_i32, %c0_i32_0 : i32, i32
  }
  func.func @transform_3(%arg0: i32) -> (i32, i32, i32) {
    %c0_i32 = arith.constant 0 : i32
    %c0_i32_0 = arith.constant 0 : i32
    %c0_i32_1 = arith.constant 0 : i32
    return %c0_i32, %arg0, %c0_i32_0 : i32, i32, i32
  }
  func.func @transform_4(%arg0: i32) -> (i32, i32) {
    %c0_i32 = arith.constant 0 : i32
    %c0_i32_0 = arith.constant 0 : i32
    return %c0_i32, %arg0 : i32, i32
  }
}

</mosaic_0001>

<llo_original>
// kernel: tpu_custom_call.1
$region0: #{tpu_custom_call.1}
  #allocation0 [shape = 'u32[]', space=smem, size = 0x4, offset = 0x4, fixed_abs, tag = 'smem constant byte address 0x4 - core index']
  #allocation1 [shape = 'u32[72,128]{1,0:T(1,128)}', space=vmem, size = 0x9000, scoped, tag = 'internal scratch']
  %s0 = inlined_call_operand.vmem [shape: f32[2,128,4], index: 0, kind: input, shape index: {}]
  %s1 = inlined_call_operand.vmem [shape: f32[2,4,128], index: 1, kind: input, shape index: {}]
  %s2 = inlined_call_operand.vmem [shape: f32[128,128], index: 2, kind: input, shape index: {}]
  %s3 = inlined_call_operand.hbm [shape: f32[2,128,128], index: 3, kind: output, shape index: {0}]
  %s4 = inlined_call_operand.hbm [shape: f32[2,128], index: 4, kind: output, shape index: {1}]
  %5 = xla_tuple %s3, %s4
  %s6 = sld [smem:[#allocation0]]
  $region30: #{tpu_custom_call.1} parent=0
    _
  %s8 = ssub.s32 1, %s6
  %s9 = scalar_select 0, %s8, %s6
  $region1: #{tpu_custom_call.1} parent=0
    #allocation2 [shape = 'u8[131072]{0}', space=vmem, size = 0x20000, scoped, tag = 'output window, operand 0, single buffered']
    #allocation3 [shape = 's32[1]{0}', space=sflag, size = 0x4, scoped, tag = 'scoped memory for tpu_custom_call.1']
    #allocation4 [shape = 'u8[1024]{0}', space=vmem, size = 0x400, scoped, tag = 'output window, operand 1, single buffered']
    #allocation5 [shape = 's32[1]{0}', space=sflag, size = 0x4, scoped, tag = 'scoped memory for tpu_custom_call.1']
    %10 = vsyncpa [#allocation3], 0
    %11 = vsyncpa [#allocation5], 0
    // Predicated region
    $region2: #{tpu_custom_call.1} parent=1 // pred_check
      _
    $region3: #{tpu_custom_call.1} parent=1 // pred_check_branch
      %13 = sbr.rel (0) target = $region5
    $region4: #{tpu_custom_call.1} parent=1 // pred_region
      _
    $region5: #{tpu_custom_call.1} parent=1 // pred_fallthru
      _
    // Predicated region
    $region6: #{tpu_custom_call.1} parent=1 // pred_check
      _
    $region7: #{tpu_custom_call.1} parent=1 // pred_check_branch
      %15 = sbr.rel (0) target = $region9
    $region8: #{tpu_custom_call.1} parent=1 // pred_region
      _
    $region9: #{tpu_custom_call.1} parent=1 // pred_fallthru
      _
    // Predicated region
    $region10: #{tpu_custom_call.1} parent=1 // pred_check
      _
    $region11: #{tpu_custom_call.1} parent=1 // pred_check_branch
      %17 = sbr.rel (0) target = $region13
    $region12: #{tpu_custom_call.1} parent=1 // pred_region
      _
    $region13: #{tpu_custom_call.1} parent=1 // pred_fallthru
      _
    %v18 = vld [vmem:[%s2] sm:$0xff]
    %v19 = vld [vmem:[%s2 + $0x8] sm:$0xff]
    %v20 = vld [vmem:[%s2 + $0x10] sm:$0xff]
    %v21 = vld [vmem:[%s2 + $0x18] sm:$0xff]
    %v22 = vld [vmem:[%s2 + $0x20] sm:$0xff]
    %v23 = vld [vmem:[%s2 + $0x28] sm:$0xff]
    %v24 = vld [vmem:[%s2 + $0x30] sm:$0xff]
    %v25 = vld [vmem:[%s2 + $0x38] sm:$0xff]
    %v26 = vld [vmem:[%s2 + $0x40] sm:$0xff]
    %v27 = vld [vmem:[%s2 + $0x48] sm:$0xff]
    %v28 = vld [vmem:[%s2 + $0x50] sm:$0xff]
    %v29 = vld [vmem:[%s2 + $0x58] sm:$0xff]
    %v30 = vld [vmem:[%s2 + $0x60] sm:$0xff]
    %v31 = vld [vmem:[%s2 + $0x68] sm:$0xff]
    %v32 = vld [vmem:[%s2 + $0x70] sm:$0xff]
    %v33 = vld [vmem:[%s2 + $0x78] sm:$0xff]
    %v34 = vld [vmem:[%s0] sm:$0xff]
    %v35 = vld [vmem:[%s0 + $0x8] sm:$0xff]
    %v36 = vld [vmem:[%s0 + $0x10] sm:$0xff]
    %v37 = vld [vmem:[%s0 + $0x18] sm:$0xff]
    %v38 = vld [vmem:[%s0 + $0x20] sm:$0xff]
    %v39 = vld [vmem:[%s0 + $0x28] sm:$0xff]
    %v40 = vld [vmem:[%s0 + $0x30] sm:$0xff]
    %v41 = vld [vmem:[%s0 + $0x38] sm:$0xff]
    %v42 = vld [vmem:[%s0 + $0x40] sm:$0xff]
    %v43 = vld [vmem:[%s0 + $0x48] sm:$0xff]
    %v44 = vld [vmem:[%s0 + $0x50] sm:$0xff]
    %v45 = vld [vmem:[%s0 + $0x58] sm:$0xff]
    %v46 = vld [vmem:[%s0 + $0x60] sm:$0xff]
    %v47 = vld [vmem:[%s0 + $0x68] sm:$0xff]
    %v48 = vld [vmem:[%s0 + $0x70] sm:$0xff]
    %v49 = vld [vmem:[%s0 + $0x78] sm:$0xff]
    %v50 = vld [vmem:[%s1] sm:$0xf]
    %vm51 = vcmask 31744
    %v53 = vsel %vm51, %v34, 0
    %v56 = vsel %vm51, %v35, 0
    %v59 = vsel %vm51, %v36, 0
    %v62 = vsel %vm51, %v37, 0
    %v65 = vsel %vm51, %v38, 0
    %v68 = vsel %vm51, %v39, 0
    %v71 = vsel %vm51, %v40, 0
    %v74 = vsel %vm51, %v41, 0
    %v77 = vsel %vm51, %v42, 0
    %v80 = vsel %vm51, %v43, 0
    %v83 = vsel %vm51, %v44, 0
    %v86 = vsel %vm51, %v45, 0
    %v89 = vsel %vm51, %v46, 0
    %v92 = vsel %vm51, %v47, 0
    %v95 = vsel %vm51, %v48, 0
    %v98 = vsel %vm51, %v49, 0
    %vm100 = vcmask 1043456
    %v102 = vsel %vm100, %v50, 0
    %104 = vmatpush.msra.mxu0 0.0
    %105 = vmatpush.msra.mxu0 0.0
    %106 = vmatpush.msra.mxu0 0.0
    %107 = vmatpush.msra.mxu0 0.0
    %108 = vmatpush.msra.mxu0 0.0
    %109 = vmatpush.msra.mxu0 0.0
    %110 = vmatpush.msra.mxu0 0.0
    %111 = vmatpush.msra.mxu0 0.0
    %112 = vmatpush.msra.mxu0 0.0
    %113 = vmatpush.msra.mxu0 0.0
    %114 = vmatpush.msra.mxu0 0.0
    %115 = vmatpush.msra.mxu0 0.0
    %116 = vmatpush.msra.mxu0 0.0
    %117 = vmatpush.msra.mxu0 0.0
    %118 = vmatpush.msra.mxu0 0.0
    %119 = vmatpush.msra.mxu0 %v102
    %120 = vmatmul.f32.gmra.mxu0 %v53
    %v121 = vpop.f32.mrf.mxu0
    %v122 = vadd.f32 0.0, %v121
    %123 = vmatmul.f32.gmra.mxu0 %v56
    %v124 = vpop.f32.mrf.mxu0
    %v125 = vadd.f32 0.0, %v124
    %126 = vmatmul.f32.gmra.mxu0 %v59
    %v127 = vpop.f32.mrf.mxu0
    %v128 = vadd.f32 0.0, %v127
    %129 = vmatmul.f32.gmra.mxu0 %v62
    %v130 = vpop.f32.mrf.mxu0
    %v131 = vadd.f32 0.0, %v130
    %132 = vmatmul.f32.gmra.mxu0 %v65
    %v133 = vpop.f32.mrf.mxu0
    %v134 = vadd.f32 0.0, %v133
    %135 = vmatmul.f32.gmra.mxu0 %v68
    %v136 = vpop.f32.mrf.mxu0
    %v137 = vadd.f32 0.0, %v136
    %138 = vmatmul.f32.gmra.mxu0 %v71
    %v139 = vpop.f32.mrf.mxu0
    %v140 = vadd.f32 0.0, %v139
    %141 = vmatmul.f32.gmra.mxu0 %v74
    %v142 = vpop.f32.mrf.mxu0
    %v143 = vadd.f32 0.0, %v142
    %144 = vmatmul.f32.gmra.mxu0 %v77
    %v145 = vpop.f32.mrf.mxu0
    %v146 = vadd.f32 0.0, %v145
    %147 = vmatmul.f32.gmra.mxu0 %v80
    %v148 = vpop.f32.mrf.mxu0
    %v149 = vadd.f32 0.0, %v148
    %150 = vmatmul.f32.gmra.mxu0 %v83
    %v151 = vpop.f32.mrf.mxu0
    %v152 = vadd.f32 0.0, %v151
    %153 = vmatmul.f32.gmra.mxu0 %v86
    %v154 = vpop.f32.mrf.mxu0
    %v155 = vadd.f32 0.0, %v154
    %156 = vmatmul.f32.gmra.mxu0 %v89
    %v157 = vpop.f32.mrf.mxu0
    %v158 = vadd.f32 0.0, %v157
    %159 = vmatmul.f32.gmra.mxu0 %v92
    %v160 = vpop.f32.mrf.mxu0
    %v161 = vadd.f32 0.0, %v160
    %162 = vmatmul.f32.gmra.mxu0 %v95
    %v163 = vpop.f32.mrf.mxu0
    %v164 = vadd.f32 0.0, %v163
    %165 = vmatmul.f32.gmra.mxu0 %v98
    %v166 = vpop.f32.mrf.mxu0
    %v167 = vadd.f32 0.0, %v166
    %168 = vdwg.mxu0
    %v169 = vmax.f32 %v122, 0.0
    %v170 = vmax.f32 %v125, 0.0
    %v171 = vmax.f32 %v128, 0.0
    %v172 = vmax.f32 %v131, 0.0
    %v173 = vmax.f32 %v134, 0.0
    %v174 = vmax.f32 %v137, 0.0
    %v175 = vmax.f32 %v140, 0.0
    %v176 = vmax.f32 %v143, 0.0
    %v177 = vmax.f32 %v146, 0.0
    %v178 = vmax.f32 %v149, 0.0
    %v179 = vmax.f32 %v152, 0.0
    %v180 = vmax.f32 %v155, 0.0
    %v181 = vmax.f32 %v158, 0.0
    %v182 = vmax.f32 %v161, 0.0
    %v183 = vmax.f32 %v164, 0.0
    %v184 = vmax.f32 %v167, 0.0
    %185 = vmatpush.msra.mxu0 %v33
    %186 = vmatpush.msra.mxu0 %v32
    %187 = vmatpush.msra.mxu0 %v31
    %188 = vmatpush.msra.mxu0 %v30
    %189 = vmatpush.msra.mxu0 %v29
    %190 = vmatpush.msra.mxu0 %v28
    %191 = vmatpush.msra.mxu0 %v27
    %192 = vmatpush.msra.mxu0 %v26
    %193 = vmatpush.msra.mxu0 %v25
    %194 = vmatpush.msra.mxu0 %v24
    %195 = vmatpush.msra.mxu0 %v23
    %196 = vmatpush.msra.mxu0 %v22
    %197 = vmatpush.msra.mxu0 %v21
    %198 = vmatpush.msra.mxu0 %v20
    %199 = vmatpush.msra.mxu0 %v19
    %200 = vmatpush.msra.mxu0 %v18
    %201 = vmatmul.f32.gmra.mxu0 %v169
    %v202 = vpop.f32.mrf.mxu0
    %v203 = vadd.f32 0.0, %v202
    %204 = vmatmul.f32.gmra.mxu0 %v170
    %v205 = vpop.f32.mrf.mxu0
    %v206 = vadd.f32 0.0, %v205
    %207 = vmatmul.f32.gmra.mxu0 %v171
    %v208 = vpop.f32.mrf.mxu0
    %v209 = vadd.f32 0.0, %v208
    %210 = vmatmul.f32.gmra.mxu0 %v172
    %v211 = vpop.f32.mrf.mxu0
    %v212 = vadd.f32 0.0, %v211
    %213 = vmatmul.f32.gmra.mxu0 %v173
    %v214 = vpop.f32.mrf.mxu0
    %v215 = vadd.f32 0.0, %v214
    %216 = vmatmul.f32.gmra.mxu0 %v174
    %v217 = vpop.f32.mrf.mxu0
    %v218 = vadd.f32 0.0, %v217
    %219 = vmatmul.f32.gmra.mxu0 %v175
    %v220 = vpop.f32.mrf.mxu0
    %v221 = vadd.f32 0.0, %v220
    %222 = vmatmul.f32.gmra.mxu0 %v176
    %v223 = vpop.f32.mrf.mxu0
    %v224 = vadd.f32 0.0, %v223
    %225 = vmatmul.f32.gmra.mxu0 %v177
    %v226 = vpop.f32.mrf.mxu0
    %v227 = vadd.f32 0.0, %v226
    %228 = vmatmul.f32.gmra.mxu0 %v178
    %v229 = vpop.f32.mrf.mxu0
    %v230 = vadd.f32 0.0, %v229
    %231 = vmatmul.f32.gmra.mxu0 %v179
    %v232 = vpop.f32.mrf.mxu0
    %v233 = vadd.f32 0.0, %v232
    %234 = vmatmul.f32.gmra.mxu0 %v180
    %v235 = vpop.f32.mrf.mxu0
    %v236 = vadd.f32 0.0, %v235
    %237 = vmatmul.f32.gmra.mxu0 %v181
    %v238 = vpop.f32.mrf.mxu0
    %v239 = vadd.f32 0.0, %v238
    %240 = vmatmul.f32.gmra.mxu0 %v182
    %v241 = vpop.f32.mrf.mxu0
    %v242 = vadd.f32 0.0, %v241
    %243 = vmatmul.f32.gmra.mxu0 %v183
    %v244 = vpop.f32.mrf.mxu0
    %v245 = vadd.f32 0.0, %v244
    %246 = vmatmul.f32.gmra.mxu0 %v184
    %v247 = vpop.f32.mrf.mxu0
    %v248 = vadd.f32 0.0, %v247
    %249 = vdwg.mxu0
    %s250 = scalar_lea.vmem %s0, 128
    %v251 = vld [vmem:[%s250] sm:$0xff]
    %v252 = vld [vmem:[%s250 + $0x8] sm:$0xff]
    %v253 = vld [vmem:[%s250 + $0x10] sm:$0xff]
    %v254 = vld [vmem:[%s250 + $0x18] sm:$0xff]
    %v255 = vld [vmem:[%s250 + $0x20] sm:$0xff]
    %v256 = vld [vmem:[%s250 + $0x28] sm:$0xff]
    %v257 = vld [vmem:[%s250 + $0x30] sm:$0xff]
    %v258 = vld [vmem:[%s250 + $0x38] sm:$0xff]
    %v259 = vld [vmem:[%s250 + $0x40] sm:$0xff]
    %v260 = vld [vmem:[%s250 + $0x48] sm:$0xff]
    %v261 = vld [vmem:[%s250 + $0x50] sm:$0xff]
    %v262 = vld [vmem:[%s250 + $0x58] sm:$0xff]
    %v263 = vld [vmem:[%s250 + $0x60] sm:$0xff]
    %v264 = vld [vmem:[%s250 + $0x68] sm:$0xff]
    %v265 = vld [vmem:[%s250 + $0x70] sm:$0xff]
    %v266 = vld [vmem:[%s250 + $0x78] sm:$0xff]
    %s267 = scalar_lea.vmem %s1, 4
    %v268 = vld [vmem:[%s267] sm:$0xf]
    %v270 = vsel %vm51, %v251, 0
    %v273 = vsel %vm51, %v252, 0
    %v276 = vsel %vm51, %v253, 0
    %v279 = vsel %vm51, %v254, 0
    %v282 = vsel %vm51, %v255, 0
    %v285 = vsel %vm51, %v256, 0
    %v288 = vsel %vm51, %v257, 0
    %v291 = vsel %vm51, %v258, 0
    %v294 = vsel %vm51, %v259, 0
    %v297 = vsel %vm51, %v260, 0
    %v300 = vsel %vm51, %v261, 0
    %v303 = vsel %vm51, %v262, 0
    %v306 = vsel %vm51, %v263, 0
    %v309 = vsel %vm51, %v264, 0
    %v312 = vsel %vm51, %v265, 0
    %v315 = vsel %vm51, %v266, 0
    %v318 = vsel %vm100, %v268, 0
    %320 = vmatpush.msra.mxu0 0.0
    %321 = vmatpush.msra.mxu0 0.0
    %322 = vmatpush.msra.mxu0 0.0
    %323 = vmatpush.msra.mxu0 0.0
    %324 = vmatpush.msra.mxu0 0.0
    %325 = vmatpush.msra.mxu0 0.0
    %326 = vmatpush.msra.mxu0 0.0
    %327 = vmatpush.msra.mxu0 0.0
    %328 = vmatpush.msra.mxu0 0.0
    %329 = vmatpush.msra.mxu0 0.0
    %330 = vmatpush.msra.mxu0 0.0
    %331 = vmatpush.msra.mxu0 0.0
    %332 = vmatpush.msra.mxu0 0.0
    %333 = vmatpush.msra.mxu0 0.0
    %334 = vmatpush.msra.mxu0 0.0
    %335 = vmatpush.msra.mxu0 %v318
    %336 = vmatmul.f32.gmra.mxu0 %v270
    %v337 = vpop.f32.mrf.mxu0
    %v338 = vadd.f32 0.0, %v337
    %339 = vmatmul.f32.gmra.mxu0 %v273
    %v340 = vpop.f32.mrf.mxu0
    %v341 = vadd.f32 0.0, %v340
    %342 = vmatmul.f32.gmra.mxu0 %v276
    %v343 = vpop.f32.mrf.mxu0
    %v344 = vadd.f32 0.0, %v343
    %345 = vmatmul.f32.gmra.mxu0 %v279
    %v346 = vpop.f32.mrf.mxu0
    %v347 = vadd.f32 0.0, %v346
    %348 = vmatmul.f32.gmra.mxu0 %v282
    %v349 = vpop.f32.mrf.mxu0
    %v350 = vadd.f32 0.0, %v349
    %351 = vmatmul.f32.gmra.mxu0 %v285
    %v352 = vpop.f32.mrf.mxu0
    %v353 = vadd.f32 0.0, %v352
    %354 = vmatmul.f32.gmra.mxu0 %v288
    %v355 = vpop.f32.mrf.mxu0
    %v356 = vadd.f32 0.0, %v355
    %357 = vmatmul.f32.gmra.mxu0 %v291
    %v358 = vpop.f32.mrf.mxu0
    %v359 = vadd.f32 0.0, %v358
    %360 = vmatmul.f32.gmra.mxu0 %v294
    %v361 = vpop.f32.mrf.mxu0
    %v362 = vadd.f32 0.0, %v361
    %363 = vmatmul.f32.gmra.mxu0 %v297
    %v364 = vpop.f32.mrf.mxu0
    %v365 = vadd.f32 0.0, %v364
    %366 = vmatmul.f32.gmra.mxu0 %v300
    %v367 = vpop.f32.mrf.mxu0
    %v368 = vadd.f32 0.0, %v367
    %369 = vmatmul.f32.gmra.mxu0 %v303
    %v370 = vpop.f32.mrf.mxu0
    %v371 = vadd.f32 0.0, %v370
    %372 = vmatmul.f32.gmra.mxu0 %v306
    %v373 = vpop.f32.mrf.mxu0
    %v374 = vadd.f32 0.0, %v373
    %375 = vmatmul.f32.gmra.mxu0 %v309
    %v376 = vpop.f32.mrf.mxu0
    %v377 = vadd.f32 0.0, %v376
    %378 = vmatmul.f32.gmra.mxu0 %v312
    %v379 = vpop.f32.mrf.mxu0
    %v380 = vadd.f32 0.0, %v379
    %381 = vmatmul.f32.gmra.mxu0 %v315
    %v382 = vpop.f32.mrf.mxu0
    %v383 = vadd.f32 0.0, %v382
    %384 = vdwg.mxu0
    %v385 = vmax.f32 %v338, 0.0
    %v386 = vmax.f32 %v341, 0.0
    %v387 = vmax.f32 %v344, 0.0
    %v388 = vmax.f32 %v347, 0.0
    %v389 = vmax.f32 %v350, 0.0
    %v390 = vmax.f32 %v353, 0.0
    %v391 = vmax.f32 %v356, 0.0
    %v392 = vmax.f32 %v359, 0.0
    %v393 = vmax.f32 %v362, 0.0
    %v394 = vmax.f32 %v365, 0.0
    %v395 = vmax.f32 %v368, 0.0
    %v396 = vmax.f32 %v371, 0.0
    %v397 = vmax.f32 %v374, 0.0
    %v398 = vmax.f32 %v377, 0.0
    %v399 = vmax.f32 %v380, 0.0
    %v400 = vmax.f32 %v383, 0.0
    %401 = vmatpush.msra.mxu0 %v33
    %402 = vmatpush.msra.mxu0 %v32
    %403 = vmatpush.msra.mxu0 %v31
    %404 = vmatpush.msra.mxu0 %v30
    %405 = vmatpush.msra.mxu0 %v29
    %406 = vmatpush.msra.mxu0 %v28
    %407 = vmatpush.msra.mxu0 %v27
    %408 = vmatpush.msra.mxu0 %v26
    %409 = vmatpush.msra.mxu0 %v25
    %410 = vmatpush.msra.mxu0 %v24
    %411 = vmatpush.msra.mxu0 %v23
    %412 = vmatpush.msra.mxu0 %v22
    %413 = vmatpush.msra.mxu0 %v21
    %414 = vmatpush.msra.mxu0 %v20
    %415 = vmatpush.msra.mxu0 %v19
    %416 = vmatpush.msra.mxu0 %v18
    %417 = vmatmul.f32.gmra.mxu0 %v385
    %v418 = vpop.f32.mrf.mxu0
    %v419 = vadd.f32 0.0, %v418
    %420 = vmatmul.f32.gmra.mxu0 %v386
    %v421 = vpop.f32.mrf.mxu0
    %v422 = vadd.f32 0.0, %v421
    %423 = vmatmul.f32.gmra.mxu0 %v387
    %v424 = vpop.f32.mrf.mxu0
    %v425 = vadd.f32 0.0, %v424
    %426 = vmatmul.f32.gmra.mxu0 %v388
    %v427 = vpop.f32.mrf.mxu0
    %v428 = vadd.f32 0.0, %v427
    %429 = vmatmul.f32.gmra.mxu0 %v389
    %v430 = vpop.f32.mrf.mxu0
    %v431 = vadd.f32 0.0, %v430
    %432 = vmatmul.f32.gmra.mxu0 %v390
    %v433 = vpop.f32.mrf.mxu0
    %v434 = vadd.f32 0.0, %v433
    %435 = vmatmul.f32.gmra.mxu0 %v391
    %v436 = vpop.f32.mrf.mxu0
    %v437 = vadd.f32 0.0, %v436
    %438 = vmatmul.f32.gmra.mxu0 %v392
    %v439 = vpop.f32.mrf.mxu0
    %v440 = vadd.f32 0.0, %v439
    %441 = vmatmul.f32.gmra.mxu0 %v393
    %v442 = vpop.f32.mrf.mxu0
    %v443 = vadd.f32 0.0, %v442
    %444 = vmatmul.f32.gmra.mxu0 %v394
    %v445 = vpop.f32.mrf.mxu0
    %v446 = vadd.f32 0.0, %v445
    %447 = vmatmul.f32.gmra.mxu0 %v395
    %v448 = vpop.f32.mrf.mxu0
    %v449 = vadd.f32 0.0, %v448
    %450 = vmatmul.f32.gmra.mxu0 %v396
    %v451 = vpop.f32.mrf.mxu0
    %v452 = vadd.f32 0.0, %v451
    %453 = vmatmul.f32.gmra.mxu0 %v397
    %v454 = vpop.f32.mrf.mxu0
    %v455 = vadd.f32 0.0, %v454
    %456 = vmatmul.f32.gmra.mxu0 %v398
    %v457 = vpop.f32.mrf.mxu0
    %v458 = vadd.f32 0.0, %v457
    %459 = vmatmul.f32.gmra.mxu0 %v399
    %v460 = vpop.f32.mrf.mxu0
    %v461 = vadd.f32 0.0, %v460
    %462 = vmatmul.f32.gmra.mxu0 %v400
    %v463 = vpop.f32.mrf.mxu0
    %v464 = vadd.f32 0.0, %v463
    %465 = vdwg.mxu0
    %466 = vst [vmem:[#allocation2] sm:$0xff] %v203
    %467 = vst [vmem:[#allocation2 + $0x8] sm:$0xff] %v206
    %468 = vst [vmem:[#allocation2 + $0x10] sm:$0xff] %v209
    %469 = vst [vmem:[#allocation2 + $0x18] sm:$0xff] %v212
    %470 = vst [vmem:[#allocation2 + $0x20] sm:$0xff] %v215
    %471 = vst [vmem:[#allocation2 + $0x28] sm:$0xff] %v218
    %472 = vst [vmem:[#allocation2 + $0x30] sm:$0xff] %v221
    %473 = vst [vmem:[#allocation2 + $0x38] sm:$0xff] %v224
    %474 = vst [vmem:[#allocation2 + $0x40] sm:$0xff] %v227
    %475 = vst [vmem:[#allocation2 + $0x48] sm:$0xff] %v230
    %476 = vst [vmem:[#allocation2 + $0x50] sm:$0xff] %v233
    %477 = vst [vmem:[#allocation2 + $0x58] sm:$0xff] %v236
    %478 = vst [vmem:[#allocation2 + $0x60] sm:$0xff] %v239
    %479 = vst [vmem:[#allocation2 + $0x68] sm:$0xff] %v242
    %480 = vst [vmem:[#allocation2 + $0x70] sm:$0xff] %v245
    %481 = vst [vmem:[#allocation2 + $0x78] sm:$0xff] %v248
    %482 = vst [vmem:[#allocation2 + $0x80] sm:$0xff] %v419
    %483 = vst [vmem:[#allocation2 + $0x88] sm:$0xff] %v422
    %484 = vst [vmem:[#allocation2 + $0x90] sm:$0xff] %v425
    %485 = vst [vmem:[#allocation2 + $0x98] sm:$0xff] %v428
    %486 = vst [vmem:[#allocation2 + $0xa0] sm:$0xff] %v431
    %487 = vst [vmem:[#allocation2 + $0xa8] sm:$0xff] %v434
    %488 = vst [vmem:[#allocation2 + $0xb0] sm:$0xff] %v437
    %489 = vst [vmem:[#allocation2 + $0xb8] sm:$0xff] %v440
    %490 = vst [vmem:[#allocation2 + $0xc0] sm:$0xff] %v443
    %491 = vst [vmem:[#allocation2 + $0xc8] sm:$0xff] %v446
    %492 = vst [vmem:[#allocation2 + $0xd0] sm:$0xff] %v449
    %493 = vst [vmem:[#allocation2 + $0xd8] sm:$0xff] %v452
    %494 = vst [vmem:[#allocation2 + $0xe0] sm:$0xff] %v455
    %495 = vst [vmem:[#allocation2 + $0xe8] sm:$0xff] %v458
    %496 = vst [vmem:[#allocation2 + $0xf0] sm:$0xff] %v461
    %497 = vst [vmem:[#allocation2 + $0xf8] sm:$0xff] %v464
    %v498 = vlaneseq
    %v499 = vand.u32 %v498, 127
    %vm500 = vcmp.lt.s32.totalorder %v499, 16
    %v501 = vsel %vm500, %v203, inf
    %v502 = vsel %vm500, %v206, inf
    %v503 = vsel %vm500, %v209, inf
    %v504 = vsel %vm500, %v212, inf
    %v505 = vsel %vm500, %v215, inf
    %v506 = vsel %vm500, %v218, inf
    %v507 = vsel %vm500, %v221, inf
    %v508 = vsel %vm500, %v224, inf
    %v509 = vsel %vm500, %v227, inf
    %v510 = vsel %vm500, %v230, inf
    %v511 = vsel %vm500, %v233, inf
    %v512 = vsel %vm500, %v236, inf
    %v513 = vsel %vm500, %v239, inf
    %v514 = vsel %vm500, %v242, inf
    %v515 = vsel %vm500, %v245, inf
    %v516 = vsel %vm500, %v248, inf
    %v517 = vsel %vm500, %v419, inf
    %v518 = vsel %vm500, %v422, inf
    %v519 = vsel %vm500, %v425, inf
    %v520 = vsel %vm500, %v428, inf
    %v521 = vsel %vm500, %v431, inf
    %v522 = vsel %vm500, %v434, inf
    %v523 = vsel %vm500, %v437, inf
    %v524 = vsel %vm500, %v440, inf
    %v525 = vsel %vm500, %v443, inf
    %v526 = vsel %vm500, %v446, inf
    %v527 = vsel %vm500, %v449, inf
    %v528 = vsel %vm500, %v452, inf
    %v529 = vsel %vm500, %v455, inf
    %v530 = vsel %vm500, %v458, inf
    %v531 = vsel %vm500, %v461, inf
    %v532 = vsel %vm500, %v464, inf
    %533 = vmin.xlane.f32.xlu0 %v501
    %v534 = vpop.xlane.xlu0 %533
    %535 = vmin.xlane.f32.xlu0 %v502
    %v536 = vpop.xlane.xlu0 %535
    %537 = vmin.xlane.f32.xlu0 %v503
    %v538 = vpop.xlane.xlu0 %537
    %539 = vmin.xlane.f32.xlu0 %v504
    %v540 = vpop.xlane.xlu0 %539
    %541 = vmin.xlane.f32.xlu0 %v505
    %v542 = vpop.xlane.xlu0 %541
    %543 = vmin.xlane.f32.xlu0 %v506
    %v544 = vpop.xlane.xlu0 %543
    %545 = vmin.xlane.f32.xlu0 %v507
    %v546 = vpop.xlane.xlu0 %545
    %547 = vmin.xlane.f32.xlu0 %v508
    %v548 = vpop.xlane.xlu0 %547
    %549 = vmin.xlane.f32.xlu0 %v509
    %v550 = vpop.xlane.xlu0 %549
    %551 = vmin.xlane.f32.xlu0 %v510
    %v552 = vpop.xlane.xlu0 %551
    %553 = vmin.xlane.f32.xlu0 %v511
    %v554 = vpop.xlane.xlu0 %553
    %555 = vmin.xlane.f32.xlu0 %v512
    %v556 = vpop.xlane.xlu0 %555
    %557 = vmin.xlane.f32.xlu0 %v513
    %v558 = vpop.xlane.xlu0 %557
    %559 = vmin.xlane.f32.xlu0 %v514
    %v560 = vpop.xlane.xlu0 %559
    %561 = vmin.xlane.f32.xlu0 %v515
    %v562 = vpop.xlane.xlu0 %561
    %563 = vmin.xlane.f32.xlu0 %v516
    %v564 = vpop.xlane.xlu0 %563
    %565 = vmin.xlane.f32.xlu0 %v517
    %v566 = vpop.xlane.xlu0 %565
    %567 = vmin.xlane.f32.xlu0 %v518
    %v568 = vpop.xlane.xlu0 %567
    %569 = vmin.xlane.f32.xlu0 %v519
    %v570 = vpop.xlane.xlu0 %569
    %571 = vmin.xlane.f32.xlu0 %v520
    %v572 = vpop.xlane.xlu0 %571
    %573 = vmin.xlane.f32.xlu0 %v521
    %v574 = vpop.xlane.xlu0 %573
    %575 = vmin.xlane.f32.xlu0 %v522
    %v576 = vpop.xlane.xlu0 %575
    %577 = vmin.xlane.f32.xlu0 %v523
    %v578 = vpop.xlane.xlu0 %577
    %579 = vmin.xlane.f32.xlu0 %v524
    %v580 = vpop.xlane.xlu0 %579
    %581 = vmin.xlane.f32.xlu0 %v525
    %v582 = vpop.xlane.xlu0 %581
    %583 = vmin.xlane.f32.xlu0 %v526
    %v584 = vpop.xlane.xlu0 %583
    %585 = vmin.xlane.f32.xlu0 %v527
    %v586 = vpop.xlane.xlu0 %585
    %587 = vmin.xlane.f32.xlu0 %v528
    %v588 = vpop.xlane.xlu0 %587
    %589 = vmin.xlane.f32.xlu0 %v529
    %v590 = vpop.xlane.xlu0 %589
    %591 = vmin.xlane.f32.xlu0 %v530
    %v592 = vpop.xlane.xlu0 %591
    %593 = vmin.xlane.f32.xlu0 %v531
    %v594 = vpop.xlane.xlu0 %593
    %595 = vmin.xlane.f32.xlu0 %v532
    %v596 = vpop.xlane.xlu0 %595
    %v629 = vperm.slane %v534, %v499
    %v630 = vadd.s32 %v499, 4294967288
    %v631 = vperm.slane %v536, %v630
    %vm632 = vcmask 130112
    %v633 = vsel %vm632, %v631, %v629
    %v634 = vadd.s32 %v499, 4294967280
    %v635 = vperm.slane %v538, %v634
    %vm636 = vcmask 195712
    %v637 = vsel %vm636, %v635, %v633
    %v638 = vadd.s32 %v499, 4294967272
    %v639 = vperm.slane %v540, %v638
    %vm640 = vcmask 261312
    %v641 = vsel %vm640, %v639, %v637
    %v642 = vadd.s32 %v499, 4294967264
    %v643 = vperm.slane %v542, %v642
    %vm644 = vcmask 326912
    %v645 = vsel %vm644, %v643, %v641
    %v646 = vadd.s32 %v499, 4294967256
    %v647 = vperm.slane %v544, %v646
    %vm648 = vcmask 392512
    %v649 = vsel %vm648, %v647, %v645
    %v650 = vadd.s32 %v499, 4294967248
    %v651 = vperm.slane %v546, %v650
    %vm652 = vcmask 458112
    %v653 = vsel %vm652, %v651, %v649
    %v654 = vadd.s32 %v499, 4294967240
    %v655 = vperm.slane %v548, %v654
    %vm656 = vcmask 523712
    %v657 = vsel %vm656, %v655, %v653
    %v658 = vadd.s32 %v499, 4294967232
    %v659 = vperm.slane %v550, %v658
    %vm660 = vcmask 589312
    %v661 = vsel %vm660, %v659, %v657
    %v662 = vadd.s32 %v499, 4294967224
    %v663 = vperm.slane %v552, %v662
    %vm664 = vcmask 654912
    %v665 = vsel %vm664, %v663, %v661
    %v666 = vadd.s32 %v499, 4294967216
    %v667 = vperm.slane %v554, %v666
    %vm668 = vcmask 720512
    %v669 = vsel %vm668, %v667, %v665
    %v670 = vadd.s32 %v499, 4294967208
    %v671 = vperm.slane %v556, %v670
    %vm672 = vcmask 786112
    %v673 = vsel %vm672, %v671, %v669
    %v674 = vadd.s32 %v499, 4294967200
    %v675 = vperm.slane %v558, %v674
    %vm676 = vcmask 851712
    %v677 = vsel %vm676, %v675, %v673
    %v678 = vadd.s32 %v499, 4294967192
    %v679 = vperm.slane %v560, %v678
    %vm680 = vcmask 917312
    %v681 = vsel %vm680, %v679, %v677
    %v682 = vadd.s32 %v499, 4294967184
    %v683 = vperm.slane %v562, %v682
    %vm684 = vcmask 982912
    %v685 = vsel %vm684, %v683, %v681
    %v686 = vadd.s32 %v499, 4294967176
    %v687 = vperm.slane %v564, %v686
    %vm688 = vcmask 1048512
    %v689 = vsel %vm688, %v687, %v685
    %v690 = vperm.slane %v566, %v499
    %v691 = vperm.slane %v568, %v630
    %v692 = vsel %vm632, %v691, %v690
    %v693 = vperm.slane %v570, %v634
    %v694 = vsel %vm636, %v693, %v692
    %v695 = vperm.slane %v572, %v638
    %v696 = vsel %vm640, %v695, %v694
    %v697 = vperm.slane %v574, %v642
    %v698 = vsel %vm644, %v697, %v696
    %v699 = vperm.slane %v576, %v646
    %v700 = vsel %vm648, %v699, %v698
    %v701 = vperm.slane %v578, %v650
    %v702 = vsel %vm652, %v701, %v700
    %v703 = vperm.slane %v580, %v654
    %v704 = vsel %vm656, %v703, %v702
    %v705 = vperm.slane %v582, %v658
    %v706 = vsel %vm660, %v705, %v704
    %v707 = vperm.slane %v584, %v662
    %v708 = vsel %vm664, %v707, %v706
    %v709 = vperm.slane %v586, %v666
    %v710 = vsel %vm668, %v709, %v708
    %v711 = vperm.slane %v588, %v670
    %v712 = vsel %vm672, %v711, %v710
    %v713 = vperm.slane %v590, %v674
    %v714 = vsel %vm676, %v713, %v712
    %v715 = vperm.slane %v592, %v678
    %v716 = vsel %vm680, %v715, %v714
    %v717 = vperm.slane %v594, %v682
    %v718 = vsel %vm684, %v717, %v716
    %v719 = vperm.slane %v596, %v686
    %v720 = vsel %vm688, %v719, %v718
    %vm721 = vcmask 1041409
    %v722 = vsel %vm721, %v720, %v689
    %724 = vst [vmem:[#allocation4] sm:$0x3] %v722
    // Predicated region
    $region14: #{tpu_custom_call.1} parent=1 // pred_check
      _
    $region15: #{tpu_custom_call.1} parent=1 // pred_check_branch
      %726 = sbr.rel (0) target = $region17
    $region16: #{tpu_custom_call.1} parent=1 // pred_region
      %728 = vsyncadd [#allocation3], 0
      %s729 = sshll.u32 [#allocation2], 4
      %s730 = int_to_ptr.vmem [resolvable:$true] %s729
      %s731 = sshll.u32 %s3, 4
      %s732 = int_to_ptr.hbm [resolvable:$true] %s731
      %737 = dma.vmem_to_hbm [thread:$0]  %s730, 4096, %s732, [#allocation3], 128, 128, 8
    $region17: #{tpu_custom_call.1} parent=1 // pred_fallthru
      _
    // Predicated region
    $region18: #{tpu_custom_call.1} parent=1 // pred_check
      _
    $region19: #{tpu_custom_call.1} parent=1 // pred_check_branch
      %739 = sbr.rel (0) target = $region21
    $region20: #{tpu_custom_call.1} parent=1 // pred_region
      %741 = vsyncadd [#allocation5], 0
      %s743 = sshll.u32 [#allocation4], 4
      %s744 = int_to_ptr.vmem [resolvable:$true] %s743
      %s745 = sshll.u32 %s4, 4
      %s746 = int_to_ptr.hbm [resolvable:$true] %s745
      %748 = dma.vmem_to_hbm [thread:$0]  %s744, 32, %s746, [#allocation5]
    $region21: #{tpu_custom_call.1} parent=1 // pred_fallthru
      _
    // Predicated region
    $region22: #{tpu_custom_call.1} parent=1 // pred_check
      _
    $region23: #{tpu_custom_call.1} parent=1 // pred_check_branch
      %750 = sbr.rel (0) target = $region25
    $region24: #{tpu_custom_call.1} parent=1 // pred_region
      %752 = dma.done [#allocation3], 4096
    $region25: #{tpu_custom_call.1} parent=1 // pred_fallthru
      _
    // Predicated region
    $region26: #{tpu_custom_call.1} parent=1 // pred_check
      _
    $region27: #{tpu_custom_call.1} parent=1 // pred_check_branch
      %754 = sbr.rel (0) target = $region29
    $region28: #{tpu_custom_call.1} parent=1 // pred_region
      %756 = dma.done [#allocation5], 32
    $region29: #{tpu_custom_call.1} parent=1 // pred_fallthru
      _
    %757 = vsyncpa [#allocation3], 1
    %758 = vsyncpa [#allocation5], 1

</llo_original>
